<compile_context>
chip_gen: v5e
topology: v5e:2x2
jax: 0.10.0
libtpu: 0.0.40
codegen_flags: <defaults>
</compile_context>

<pallas_src>
import functools

import jax
import jax.numpy as jnp
from jax.experimental import pallas as pl
from jax.experimental.pallas import tpu as pltpu


def _round_up(x, m):
    return (x + m - 1) // m * m


def _vmem_capacity_bytes():
    try:
        return int(pltpu.get_tpu_info().vmem_capacity_bytes)
    except Exception:
        return 64 << 20  # conservative: v7x physical VMEM per TensorCore


def _choose_tile(n, c_label, label_itemsize, c_domain, domain_itemsize, budget_bytes):
    """Batch tile (multiple of 8) sized from the real per-row VMEM footprint."""
    c_l = _round_up(max(c_label, 1), 128)
    c_d = _round_up(max(c_domain, 1), 128)
    # Per-row footprint: double-buffered native-dtype input blocks
    # + ~3 f32 working copies per logits stream (cast / shifted / exp temps)
    # + double-buffered 128-lane-padded int32 target block
    # + the resident f32 per-row accumulator (output) block.
    per_row = (c_l * (2 * label_itemsize + 3 * 4)
               + c_d * (2 * domain_itemsize + 3 * 4)
               + 128 * 2 * 4
               + 128 * 2 * 4)
    tn = (budget_bytes // per_row) // 8 * 8
    tn = max(8, min(int(tn), 8192))
    return min(tn, _round_up(n, 8))


def _ce_rows(logits, targets):
    """Per-row cross-entropy: logits (tn, C) f32, targets (tn, 1) i32 -> (tn, 1) f32."""
    tn, c = logits.shape
    row_max = jnp.max(logits, axis=-1, keepdims=True)
    shifted = logits - row_max
    lse = jnp.log(jnp.sum(jnp.exp(shifted), axis=-1, keepdims=True))
    col = jax.lax.broadcasted_iota(jnp.int32, (tn, c), 1)
    picked = jnp.sum(jnp.where(col == targets, shifted, 0.0), axis=-1, keepdims=True)
    return lse - picked


def _adv_loss_kernel(pl_ref, pd_ref, tgt_ref, out_ref, *,
                     n_valid, tile_n, tiles_per_core, has_tail):
    p = pl.program_id(0)   # TensorCore split ("parallel")
    i = pl.program_id(1)   # per-core batch tiles ("arbitrary")
    block_idx = p * tiles_per_core + i   # unclamped: matches the row mask below

    @pl.when(i == 0)
    def _init():
        out_ref[...] = jnp.zeros_like(out_ref)

    def contribution(mask_rows):
        logits_l = pl_ref[...].astype(jnp.float32)
        logits_d = pd_ref[...].astype(jnp.float32)
        tl = tgt_ref[:, 0:1]
        td = tgt_ref[:, 1:2]
        valid = None
        if mask_rows:
            row = (jax.lax.broadcasted_iota(jnp.int32, (tile_n, 1), 0)
                   + block_idx * tile_n)
            valid = row < n_valid
            # Zero garbage rows BEFORE exp/log so padding can never go inf/nan.
            logits_l = jnp.where(valid, logits_l, 0.0)
            logits_d = jnp.where(valid, logits_d, 0.0)
        per_row = _ce_rows(logits_l, tl) + _ce_rows(logits_d, td)
        if mask_rows:
            per_row = jnp.where(valid, per_row, 0.0)
        return per_row

    if not has_tail:
        # Every tile is full and real -> no masking anywhere.
        out_ref[...] += contribution(False)
    else:
        is_tail = (block_idx + 1) * tile_n > n_valid

        @pl.when(jnp.logical_not(is_tail))
        def _full_tile():
            out_ref[...] += contribution(False)

        @pl.when(is_tail)
        def _tail_tile():
            out_ref[...] += contribution(True)


def adv_lern_loss(pred_label, targ_label, pred_domain, targ_domain, alpha=0.3,
                  *, max_rows_per_tile=None):
    """Forward of AdvLernLoss: CE(pred_label, targ_label) + CE(pred_domain, targ_domain)."""
    # alpha is accepted but unused, matching the reference PyTorch forward.
    # TODO(synk): torch CrossEntropyLoss's ignore_index=-100 is not implemented
    # (out-of-range targets are not skipped); the reference usage never passes them.
    n, c_label = pred_label.shape
    n_d, c_domain = pred_domain.shape
    assert n == n_d and n > 0, "both CE terms must share a non-empty batch dimension"

    vmem_cap = _vmem_capacity_bytes()
    vmem_limit = int(min((vmem_cap * 3) // 4, 100 << 20))
    tile_budget = (vmem_limit * 3) // 5

    tile_n = _choose_tile(n, c_label, pred_label.dtype.itemsize,
                          c_domain, pred_domain.dtype.itemsize, tile_budget)
    if max_rows_per_tile is not None:        # test/tuning hook
        tile_n = max(8, min(tile_n, _round_up(max_rows_per_tile, 8)))

    num_tiles = pl.cdiv(n, tile_n)
    cores = 2 if num_tiles >= 2 else 1       # 2-TC split on v7x; no-op on v5e/v6e
    tiles_per_core = pl.cdiv(num_tiles, cores)
    has_tail = (n % tile_n != 0) or (cores * tiles_per_core != num_tiles)

    # One merged, tiny int32 target stream: column 0 = label, column 1 = domain.
    targets = jnp.stack([targ_label.astype(jnp.int32),
                         targ_domain.astype(jnp.int32)], axis=-1)        # (n, 2)

    def in_map(p, i):
        # Clamp phantom tiles (odd num_tiles split over 2 cores) onto the last
        # real block; their rows are fully masked out in the kernel.
        return (jnp.minimum(p * tiles_per_core + i, num_tiles - 1), 0)

    kernel = functools.partial(
        _adv_loss_kernel, n_valid=n, tile_n=tile_n,
        tiles_per_core=tiles_per_core, has_tail=has_tail)

    partial_rows = pl.pallas_call(
        kernel,
        out_shape=jax.ShapeDtypeStruct((cores, tile_n, 1), jnp.float32),
        grid=(cores, tiles_per_core),
        in_specs=[
            pl.BlockSpec((tile_n, c_label), in_map),    # label logits (native dtype)
            pl.BlockSpec((tile_n, c_domain), in_map),   # domain logits (native dtype)
            pl.BlockSpec((tile_n, 2), in_map),          # merged int32 targets
        ],
        # Same block across the "arbitrary" axis -> resident per-core accumulator.
        out_specs=pl.BlockSpec((None, tile_n, 1), lambda p, i: (p, 0, 0)),
        compiler_params=pltpu.CompilerParams(
            dimension_semantics=("parallel", "arbitrary"),
            vmem_limit_bytes=vmem_limit),
    )(pred_label, pred_domain, targets)

    # Both CE terms are means over the same batch N -> sum of everything / N.
    return jnp.sum(partial_rows) / jnp.float32(n)


def _reference_loss(pred_label, targ_label, pred_domain, targ_domain):
    def ce(logits, t):
        logits = logits.astype(jnp.float32)
        lse = jax.scipy.special.logsumexp(logits, axis=-1)
        picked = jnp.take_along_axis(
            logits, t[:, None].astype(jnp.int32), axis=-1)[:, 0]
        return jnp.mean(lse - picked)
    return ce(pred_label, targ_label) + ce(pred_domain, targ_domain)


if __name__ == "__main__":
    key = jax.random.PRNGKey(0)
    k1, k2, k3, k4 = jax.random.split(key, 4)

    n_label_classes = 16
    n_domain_classes = 4

    # Case 1: small batch -> single tile, single core, no-mask fast path.
    batch = 8
    pred_label = jax.random.normal(k1, (batch, n_label_classes), dtype=jnp.float32)
    targ_label = jax.random.randint(k2, (batch,), 0, n_label_classes, dtype=jnp.int32)
    pred_domain = jax.random.normal(k3, (batch, n_domain_classes), dtype=jnp.float32)
    targ_domain = jax.random.randint(k4, (batch,), 0, n_domain_classes, dtype=jnp.int32)

    loss = jax.block_until_ready(
        adv_lern_loss(pred_label, targ_label, pred_domain, targ_domain, alpha=0.3))
    ref = _reference_loss(pred_label, targ_label, pred_domain, targ_domain)
    assert jnp.allclose(loss, ref, rtol=1e-5, atol=1e-5), (loss, ref)

    # Case 2: exercises multi-tile accumulation, the 2-core parallel split,
    # the partial-tile mask path and the phantom-tile clamp.
    batch2 = 300
    pl2 = jax.random.normal(k1, (batch2, n_label_classes), dtype=jnp.float32)
    tl2 = jax.random.randint(k2, (batch2,), 0, n_label_classes, dtype=jnp.int32)
    pd2 = jax.random.normal(k3, (batch2, n_domain_classes), dtype=jnp.float32)
    td2 = jax.random.randint(k4, (batch2,), 0, n_domain_classes, dtype=jnp.int32)

    loss2 = jax.block_until_ready(
        adv_lern_loss(pl2, tl2, pd2, td2, alpha=0.3, max_rows_per_tile=64))
    ref2 = _reference_loss(pl2, tl2, pd2, td2)
    assert jnp.allclose(loss2, ref2, rtol=1e-5, atol=1e-5), (loss2, ref2)

    print("KERNEL_OK")
</pallas_src>

<mosaic_0001>
module attributes {stable_mosaic.version = 11 : i64} {
  func.func @_adv_loss_kernel(%arg0: i32, %arg1: i32, %arg2: memref<8x16xf32, #tpu.memory_space<vmem>>, %arg3: memref<8x4xf32, #tpu.memory_space<vmem>>, %arg4: memref<8x2xi32, #tpu.memory_space<vmem>>, %arg5: memref<1x8x1xf32, #tpu.memory_space<vmem>>) attributes {dimension_semantics = [#tpu.dimension_semantics<parallel>, #tpu.dimension_semantics<arbitrary>], iteration_bounds = array<i64: 1, 1>, scalar_prefetch = 0 : i64, scratch_operands = 0 : i64, tpu.core_type = #tpu.core_type<tc>, window_params = [{transform_indices = @transform_0, window_bounds = array<i64: 8, 16>}, {transform_indices = @transform_1, window_bounds = array<i64: 8, 4>}, {transform_indices = @transform_2, window_bounds = array<i64: 8, 2>}, {transform_indices = @transform_3, window_bounds = array<i64: 1, 8, 1>}]} {
    %c0_i32 = arith.constant 0 : i32
    %0 = arith.cmpi eq, %arg1, %c0_i32 : i32
    %1 = arith.extui %0 : i1 to i32
    %c0_i32_0 = arith.constant 0 : i32
    %2 = arith.cmpi ne, %1, %c0_i32_0 : i32
    scf.if %2 {
      %cst_20 = arith.constant 0.000000e+00 : f32
      %46 = vector.broadcast %cst_20 : f32 to vector<8x1xf32>
      %c0_21 = arith.constant 0 : index
      %c0_22 = arith.constant 0 : index
      %c0_23 = arith.constant 0 : index
      %47 = vector.load %arg5[%c0_21, %c0_22, %c0_23] : memref<1x8x1xf32, #tpu.memory_space<vmem>>, vector<1x8x1xf32>
      %48 = vector.shape_cast %47 : vector<1x8x1xf32> to vector<8x1xf32>
      %49 = vector.shape_cast %46 : vector<8x1xf32> to vector<1x8x1xf32>
      tpu.vector_store %arg5[%c0_21, %c0_22, %c0_23], %49 {strides = array<i32>} : memref<1x8x1xf32, #tpu.memory_space<vmem>>, vector<1x8x1xf32>,
    } else {
    }
    %c0 = arith.constant 0 : index
    %c0_1 = arith.constant 0 : index
    %c0_2 = arith.constant 0 : index
    %3 = vector.load %arg5[%c0, %c0_1, %c0_2] : memref<1x8x1xf32, #tpu.memory_space<vmem>>, vector<1x8x1xf32>
    %4 = vector.shape_cast %3 : vector<1x8x1xf32> to vector<8x1xf32>
    %c0_3 = arith.constant 0 : index
    %c0_4 = arith.constant 0 : index
    %5 = vector.load %arg2[%c0_3, %c0_4] : memref<8x16xf32, #tpu.memory_space<vmem>>, vector<8x16xf32>
    %c0_5 = arith.constant 0 : index
    %c0_6 = arith.constant 0 : index
    %6 = vector.load %arg3[%c0_5, %c0_6] : memref<8x4xf32, #tpu.memory_space<vmem>>, vector<8x4xf32>
    %c0_7 = arith.constant 0 : index
    %c0_8 = arith.constant 0 : index
    %7 = vector.load %arg4[%c0_7, %c0_8] : memref<8x2xi32, #tpu.memory_space<vmem>>, vector<8x1xi32>
    %c0_9 = arith.constant 0 : index
    %c1 = arith.constant 1 : index
    %8 = vector.load %arg4[%c0_9, %c1] : memref<8x2xi32, #tpu.memory_space<vmem>>, vector<8x1xi32>
    %cst = arith.constant dense<0xFF800000> : vector<8xf32>
    %9 = vector.multi_reduction <maximumf>, %5, %cst [1] : vector<8x16xf32> to vector<8xf32>
    %10 = vector.shape_cast %9 : vector<8xf32> to vector<8x1xf32>
    %11 = vector.broadcast %10 : vector<8x1xf32> to vector<8x16xf32>
    %12 = arith.subf %5, %11 : vector<8x16xf32>
    %13 = math.exp %12 : vector<8x16xf32>
    %cst_10 = arith.constant dense<0.000000e+00> : vector<8xf32>
    %14 = vector.multi_reduction <add>, %13, %cst_10 [1] : vector<8x16xf32> to vector<8xf32>
    %15 = vector.shape_cast %14 : vector<8xf32> to vector<8x1xf32>
    %16 = math.log %15 : vector<8x1xf32>
    %17 = tpu.iota {dimensions = array<i32: 1>} : vector<8x16xi32>
    %18 = vector.broadcast %7 : vector<8x1xi32> to vector<8x16xi32>
    %19 = arith.cmpi eq, %17, %18 : vector<8x16xi32>
    %cst_11 = arith.constant 0.000000e+00 : f32
    %20 = vector.broadcast %cst_11 : f32 to vector<8x16xf32>
    %21 = arith.select %19, %12, %20 : vector<8x16xi1>, vector<8x16xf32>
    %cst_12 = arith.constant dense<0.000000e+00> : vector<8xf32>
    %22 = vector.multi_reduction <add>, %21, %cst_12 [1] : vector<8x16xf32> to vector<8xf32>
    %23 = vector.shape_cast %22 : vector<8xf32> to vector<8x1xf32>
    %24 = arith.subf %16, %23 : vector<8x1xf32>
    %cst_13 = arith.constant dense<0xFF800000> : vector<8xf32>
    %25 = vector.multi_reduction <maximumf>, %6, %cst_13 [1] : vector<8x4xf32> to vector<8xf32>
    %26 = vector.shape_cast %25 : vector<8xf32> to vector<8x1xf32>
    %27 = vector.broadcast %26 : vector<8x1xf32> to vector<8x4xf32>
    %28 = arith.subf %6, %27 : vector<8x4xf32>
    %29 = math.exp %28 : vector<8x4xf32>
    %cst_14 = arith.constant dense<0.000000e+00> : vector<8xf32>
    %30 = vector.multi_reduction <add>, %29, %cst_14 [1] : vector<8x4xf32> to vector<8xf32>
    %31 = vector.shape_cast %30 : vector<8xf32> to vector<8x1xf32>
    %32 = math.log %31 : vector<8x1xf32>
    %33 = tpu.iota {dimensions = array<i32: 1>} : vector<8x4xi32>
    %34 = vector.broadcast %8 : vector<8x1xi32> to vector<8x4xi32>
    %35 = arith.cmpi eq, %33, %34 : vector<8x4xi32>
    %cst_15 = arith.constant 0.000000e+00 : f32
    %36 = vector.broadcast %cst_15 : f32 to vector<8x4xf32>
    %37 = arith.select %35, %28, %36 : vector<8x4xi1>, vector<8x4xf32>
    %cst_16 = arith.constant dense<0.000000e+00> : vector<8xf32>
    %38 = vector.multi_reduction <add>, %37, %cst_16 [1] : vector<8x4xf32> to vector<8xf32>
    %39 = vector.shape_cast %38 : vector<8xf32> to vector<8x1xf32>
    %40 = arith.subf %32, %39 : vector<8x1xf32>
    %41 = arith.addf %24, %40 : vector<8x1xf32>
    %42 = arith.addf %4, %41 : vector<8x1xf32>
    %c0_17 = arith.constant 0 : index
    %c0_18 = arith.constant 0 : index
    %c0_19 = arith.constant 0 : index
    %43 = vector.load %arg5[%c0_17, %c0_18, %c0_19] : memref<1x8x1xf32, #tpu.memory_space<vmem>>, vector<1x8x1xf32>
    %44 = vector.shape_cast %43 : vector<1x8x1xf32> to vector<8x1xf32>
    %45 = vector.shape_cast %42 : vector<8x1xf32> to vector<1x8x1xf32>
    tpu.vector_store %arg5[%c0_17, %c0_18, %c0_19], %45 {strides = array<i32>} : memref<1x8x1xf32, #tpu.memory_space<vmem>>, vector<1x8x1xf32>,
    return
  }
  func.func @transform_0(%arg0: i32, %arg1: i32) -> (i32, i32) {
    %c1_i32 = arith.constant 1 : i32
    %0 = arith.muli %arg0, %c1_i32 : i32
    %1 = arith.addi %0, %arg1 : i32
    %c0_i32 = arith.constant 0 : i32
    %2 = arith.minsi %1, %c0_i32 : i32
    %c0_i32_0 = arith.constant 0 : i32
    %c0_i32_1 = arith.constant 0 : i32
    return %2, %c0_i32_0 : i32, i32
  }
  func.func @transform_1(%arg0: i32, %arg1: i32) -> (i32, i32) {
    %c1_i32 = arith.constant 1 : i32
    %0 = arith.muli %arg0, %c1_i32 : i32
    %1 = arith.addi %0, %arg1 : i32
    %c0_i32 = arith.constant 0 : i32
    %2 = arith.minsi %1, %c0_i32 : i32
    %c0_i32_0 = arith.constant 0 : i32
    %c0_i32_1 = arith.constant 0 : i32
    return %2, %c0_i32_0 : i32, i32
  }
  func.func @transform_2(%arg0: i32, %arg1: i32) -> (i32, i32) {
    %c1_i32 = arith.constant 1 : i32
    %0 = arith.muli %arg0, %c1_i32 : i32
    %1 = arith.addi %0, %arg1 : i32
    %c0_i32 = arith.constant 0 : i32
    %2 = arith.minsi %1, %c0_i32 : i32
    %c0_i32_0 = arith.constant 0 : i32
    %c0_i32_1 = arith.constant 0 : i32
    return %2, %c0_i32_0 : i32, i32
  }
  func.func @transform_3(%arg0: i32, %arg1: i32) -> (i32, i32, i32) {
    %c0_i32 = arith.constant 0 : i32
    %c0_i32_0 = arith.constant 0 : i32
    %c0_i32_1 = arith.constant 0 : i32
    return %arg0, %c0_i32, %c0_i32_0 : i32, i32, i32
  }
}

</mosaic_0001>

<llo_original>
// kernel: tpu_custom_call.1
$region0: #{tpu_custom_call.1}
  #allocation0 [shape = 'u32[]', space=smem, size = 0x4, offset = 0x4, fixed_abs, tag = 'smem constant byte address 0x4 - core index']
  #allocation1 [shape = 'u32[72,128]{1,0:T(1,128)}', space=vmem, size = 0x9000, scoped, tag = 'internal scratch']
  %s0 = inlined_call_operand.vmem [shape: f32[8,16], index: 0, kind: input, shape index: {}]
  %s1 = inlined_call_operand.vmem [shape: f32[8,4], index: 1, kind: input, shape index: {}]
  %s2 = inlined_call_operand.vmem [shape: s32[8,2], index: 2, kind: input, shape index: {}]
  %s3 = inlined_call_operand.vmem [shape: f32[1,8,1], index: 3, kind: output, shape index: {}]
  %s4 = sld [smem:[#allocation0]]
  $region26: #{tpu_custom_call.1} parent=0
    _
  %s6 = ssub.s32 1, %s4
  %s7 = scalar_select 0, %s6, %s4
  // Predicated region
  $region2: #{tpu_custom_call.1} parent=0 // pred_check
    _
  $region3: #{tpu_custom_call.1} parent=0 // pred_check_branch
    %9 = sbr.rel (0) target = $region5
  $region4: #{tpu_custom_call.1} parent=0 // pred_region
    %s10 = sadd.s32 0, 0
    %p11 = scmp.lt.s32.totalorder %s10, 0
    %s12 = scalar_select %p11, %s10, 0
    %p13 = scmp.lt.s32.totalorder %s12, 0
    %s14 = scalar_select %p13, %s12, 0
    %s15 = smul.addr %s14, 8
    %s16 = scalar_lea.vmem %s0, %s15
    %s17 = sadd.s32 0, 0
    %p18 = scmp.lt.s32.totalorder %s17, 0
    %s19 = scalar_select %p18, %s17, 0
  $region5: #{tpu_custom_call.1} parent=0 // pred_fallthru
    _
  // Predicated region
  $region6: #{tpu_custom_call.1} parent=0 // pred_check
    _
  $region7: #{tpu_custom_call.1} parent=0 // pred_check_branch
    %21 = sbr.rel (0) target = $region9
  $region8: #{tpu_custom_call.1} parent=0 // pred_region
    %s22 = sadd.s32 0, 0
    %p23 = scmp.lt.s32.totalorder %s22, 0
    %s24 = scalar_select %p23, %s22, 0
    %p25 = scmp.lt.s32.totalorder %s24, 0
    %s26 = scalar_select %p25, %s24, 0
    %s27 = smul.addr %s26, 8
    %s28 = scalar_lea.vmem %s1, %s27
    %s29 = sadd.s32 0, 0
    %p30 = scmp.lt.s32.totalorder %s29, 0
    %s31 = scalar_select %p30, %s29, 0
  $region9: #{tpu_custom_call.1} parent=0 // pred_fallthru
    _
  // Predicated region
  $region10: #{tpu_custom_call.1} parent=0 // pred_check
    _
  $region11: #{tpu_custom_call.1} parent=0 // pred_check_branch
    %33 = sbr.rel (0) target = $region13
  $region12: #{tpu_custom_call.1} parent=0 // pred_region
    %s34 = sadd.s32 0, 0
    %p35 = scmp.lt.s32.totalorder %s34, 0
    %s36 = scalar_select %p35, %s34, 0
    %p37 = scmp.lt.s32.totalorder %s36, 0
    %s38 = scalar_select %p37, %s36, 0
    %s39 = smul.addr %s38, 8
    %s40 = scalar_lea.vmem %s2, %s39
    %s41 = sadd.s32 0, 0
    %p42 = scmp.lt.s32.totalorder %s41, 0
    %s43 = scalar_select %p42, %s41, 0
  $region13: #{tpu_custom_call.1} parent=0 // pred_fallthru
    _
  %s44 = sadd.s32 0, 0
  %p45 = scmp.lt.s32.totalorder %s44, 0
  %s46 = scalar_select %p45, %s44, 0
  %p47 = scmp.lt.s32.totalorder %s46, 0
  %s48 = scalar_select %p47, %s46, 0
  %s49 = smul.addr %s48, 8
  %s50 = scalar_lea.vmem %s0, %s49
  %s51 = sadd.s32 0, 0
  %p52 = scmp.lt.s32.totalorder %s51, 0
  %s53 = scalar_select %p52, %s51, 0
  %p54 = scmp.lt.s32.totalorder %s53, 0
  %s55 = scalar_select %p54, %s53, 0
  %s56 = smul.addr %s55, 8
  %s57 = scalar_lea.vmem %s1, %s56
  %s58 = sadd.s32 0, 0
  %p59 = scmp.lt.s32.totalorder %s58, 0
  %s60 = scalar_select %p59, %s58, 0
  %p61 = scmp.lt.s32.totalorder %s60, 0
  %s62 = scalar_select %p61, %s60, 0
  %s63 = smul.addr %s62, 8
  %s64 = scalar_lea.vmem %s2, %s63
  %s65 = sadd.s32 0, 0
  %p66 = scmp.lt.s32.totalorder %s65, 0
  %s67 = scalar_select %p66, %s65, 0
  %p68 = scmp.lt.s32.totalorder %s67, 0
  %s69 = scalar_select %p68, %s67, 0
  %s70 = smul.addr %s69, 8
  %s71 = scalar_lea.vmem %s0, %s70
  %s72 = sadd.s32 0, 0
  %p73 = scmp.lt.s32.totalorder %s72, 0
  %s74 = scalar_select %p73, %s72, 0
  %s75 = sadd.s32 0, 0
  %p76 = scmp.lt.s32.totalorder %s75, 0
  %s77 = scalar_select %p76, %s75, 0
  %p78 = scmp.lt.s32.totalorder %s77, 0
  %s79 = scalar_select %p78, %s77, 0
  %s80 = smul.addr %s79, 8
  %s81 = scalar_lea.vmem %s1, %s80
  %s82 = sadd.s32 0, 0
  %p83 = scmp.lt.s32.totalorder %s82, 0
  %s84 = scalar_select %p83, %s82, 0
  %s85 = sadd.s32 0, 0
  %p86 = scmp.lt.s32.totalorder %s85, 0
  %s87 = scalar_select %p86, %s85, 0
  %p88 = scmp.lt.s32.totalorder %s87, 0
  %s89 = scalar_select %p88, %s87, 0
  %s90 = smul.addr %s89, 8
  %s91 = scalar_lea.vmem %s2, %s90
  %s92 = sadd.s32 0, 0
  %p93 = scmp.lt.s32.totalorder %s92, 0
  %s94 = scalar_select %p93, %s92, 0
  %p95 = scmp.eq.s32.totalorder 0, 0
  // Predicated region
  $region14: #{tpu_custom_call.1} parent=0 // pred_check
    %p96 = pneg %p95
  $region15: #{tpu_custom_call.1} parent=0 // pred_check_branch
    %98 = sbr.rel (%p96) target = $region17
  $region16: #{tpu_custom_call.1} parent=0 // pred_region
    %vm99 = vcmask 7168
    %100 = vst.msk [vmem:[%s3] sm:$0xff] %vm99, 0.0
  $region17: #{tpu_custom_call.1} parent=0 // pred_fallthru
    _
  %v101 = vld [vmem:[%s3] sm:$0xff]
  %v102 = vld [vmem:[%s71] sm:$0xff]
  %v103 = vld [vmem:[%s81] sm:$0xff]
  %v104 = vld [vmem:[%s91] sm:$0xff]
  %vm105 = vcmask 130048
  %v106 = vsel %vm105, %v102, -inf
  %107 = vmax.xlane.f32.xlu0 %v106
  %v108 = vpop.xlane.xlu0 %107
  %v109 = vsub.f32 %v102, %v108
  %v110 = vmul.f32 %v109, 1.442695
  %v111 = vpow.pop %v110
  %v112 = vsel %vm105, %v111, 0.0
  %113 = vadd.xlane.f32.xlu0 %v112
  %v114 = vpop.xlane.xlu0 %113
  %v115 = vlog2.pop %v114
  %v116 = vmul.f32 %v115, 0.6931472
  %v117 = vlaneseq
  %v118 = vand.u32 %v117, 127
  %119 = vset.pattern.permute.xlu0 0
  %120 = vperm.xlu0 %119, %v104
  %v121 = vpop.permute.xlu0 %120
  %vm122 = vcmp.eq.s32.totalorder %v118, %v121
  %v123 = vsel %vm122, %v109, 0.0
  %v124 = vsel %vm105, %v123, 0.0
  %125 = vadd.xlane.f32.xlu0 %v124
  %v126 = vpop.xlane.xlu0 %125
  %v127 = vsub.f32 %v116, %v126
  %vm128 = vcmask 31744
  %v129 = vsel %vm128, %v103, -inf
  %130 = vmax.xlane.f32.xlu0 %v129
  %v131 = vpop.xlane.xlu0 %130
  %v132 = vsub.f32 %v103, %v131
  %v133 = vmul.f32 %v132, 1.442695
  %v134 = vpow.pop %v133
  %v135 = vsel %vm128, %v134, 0.0
  %136 = vadd.xlane.f32.xlu0 %v135
  %v137 = vpop.xlane.xlu0 %136
  %v138 = vlog2.pop %v137
  %v139 = vmul.f32 %v138, 0.6931472
  %140 = vset.pattern.permute.xlu0 1
  %141 = vperm.xlu0 %140, %v104
  %v142 = vpop.permute.xlu0 %141
  %vm143 = vcmp.eq.s32.totalorder %v118, %v142
  %v144 = vsel %vm143, %v132, 0.0
  %v145 = vsel %vm128, %v144, 0.0
  %146 = vadd.xlane.f32.xlu0 %v145
  %v147 = vpop.xlane.xlu0 %146
  %v148 = vsub.f32 %v139, %v147
  %v149 = vadd.f32 %v127, %v148
  %v150 = vadd.f32 %v101, %v149
  %vm151 = vcmask 7168
  %152 = vst.msk [vmem:[%s3] sm:$0xff] %vm151, %v150
  // Predicated region
  $region18: #{tpu_custom_call.1} parent=0 // pred_check
    _
  $region19: #{tpu_custom_call.1} parent=0 // pred_check_branch
    %154 = sbr.rel (0) target = $region21
  $region20: #{tpu_custom_call.1} parent=0 // pred_region
    _
  $region21: #{tpu_custom_call.1} parent=0 // pred_fallthru
    _
  // Predicated region
  $region22: #{tpu_custom_call.1} parent=0 // pred_check
    _
  $region23: #{tpu_custom_call.1} parent=0 // pred_check_branch
    %156 = sbr.rel (0) target = $region25
  $region24: #{tpu_custom_call.1} parent=0 // pred_region
    _
  $region25: #{tpu_custom_call.1} parent=0 // pred_fallthru
    _

</llo_original>
